<compile_context>
chip_gen: v7x
topology: tpu7x:2x2x1
jax: 0.10.0
libtpu: 0.0.40
codegen_flags: <defaults>
</compile_context>

<pallas_src>
import numpy as np

import jax
import jax.numpy as jnp
from jax.experimental import pallas as pl
from jax.experimental.pallas import tpu as pltpu


# ----------------------------- Pallas kernel ------------------------------- #
def _psp_bottleneck_kernel(x_ref, u_ref, wf_ref, r_ref, shift_ref, o_ref):
    """ReLU( X @ Wf + U @ R + shift ), f32 accumulation.

    x_ref     : (1, TP, Cin)    streaming pixel tile (bf16 or f32)
    u_ref     : (TP, S2p)       bilinear-interp matrix tile (f32)
    wf_ref    : (Cin, Cout)     bottleneck weights on feats, BN-scale folded (resident)
    r_ref     : (1, S2p, Cout)  per-image folded pyramid tensor, BN-scale folded (f32)
    shift_ref : (1, Cout)       bottleneck BN shift (beta - mean*scale)
    o_ref     : (1, TP, Cout)
    """
    acc = jnp.dot(x_ref[0], wf_ref[...], preferred_element_type=jnp.float32)
    acc = acc + jnp.dot(u_ref[...], r_ref[0], preferred_element_type=jnp.float32)
    o_ref[0] = jnp.maximum(acc + shift_ref[...], 0.0).astype(o_ref.dtype)


# ------------------------- static precompute helpers ----------------------- #
def _adaptive_pool_matrix(in_size, out_size):
    """PyTorch AdaptiveAvgPool semantics as an (out, in) averaging matrix."""
    a = np.zeros((out_size, in_size), np.float32)
    for i in range(out_size):
        s0 = (i * in_size) // out_size
        s1 = ((i + 1) * in_size + out_size - 1) // out_size  # ceil
        a[i, s0:s1] = 1.0 / (s1 - s0)
    return a


def _bilinear_matrix(dst_size, src_size):
    """align_corners=True bilinear interpolation as a (dst, src) matrix."""
    u = np.zeros((dst_size, src_size), np.float32)
    if src_size == 1:
        u[:, 0] = 1.0
        return u
    for d in range(dst_size):
        pos = 0.0 if dst_size == 1 else d * (src_size - 1) / (dst_size - 1)
        i0 = min(int(np.floor(pos)), src_size - 1)
        i1 = min(i0 + 1, src_size - 1)
        f = pos - i0
        u[d, i0] += 1.0 - f
        u[d, i1] += f
    return u


def _round_up(x, m):
    return (x + m - 1) // m * m


def _pick_row_tile(HW, Cin, Cout, S2p, x_bytes, out_bytes, vmem_budget):
    """VMEM-aware pixel-row tile: double-buffered streams + resident weights
    + f32 accumulator, rounded to an MXU-friendly multiple."""
    per_row = 2 * (Cin * x_bytes + S2p * 4 + Cout * out_bytes) + 2 * Cout * 4
    resident = Cin * Cout * x_bytes + S2p * Cout * 4 + 8 * Cout * 4
    avail = max(vmem_budget - resident - (2 << 20), per_row * 8)
    target = min(int(avail // per_row), 2048)
    for align in (256, 128, 8):
        if target >= align:
            target = (target // align) * align
            break
    target = max(target, 8)
    if HW <= target:
        return HW, per_row, resident
    return target, per_row, resident


# ------------------------------ JAX wrapper -------------------------------- #
def psp_module_forward(feats_nhwc, params, *, sizes=(1, 2, 3, 6), eps=1e-5,
                       row_tile=None, compute_dtype=jnp.bfloat16):
    """PSPModule forward.  feats_nhwc: (N, H, W, Cin).  Returns (N, H, W, Cout)."""
    N, H, W, Cin = feats_nhwc.shape
    wb = params["bottleneck_w"]                     # (Cout, Cin + len(sizes)*Cout)
    Cout = wb.shape[0]
    n_stage = len(sizes)
    assert wb.shape[1] == Cin + n_stage * Cout
    HW = H * W
    S2 = int(sum(s * s for s in sizes))
    S2p = _round_up(max(S2, 8), 64)                 # 50 -> 64, zero-padded

    out_dtype = feats_nhwc.dtype
    x_flat_in = feats_nhwc.reshape(N, HW, Cin)      # no f32 copy of the feature map
    x_flat = x_flat_in.astype(compute_dtype)        # bf16 (or f32) streaming operand

    # ---- static pooling / bilinear matrices (numpy, once) ----
    a_parts, u_parts = [], []
    for s in sizes:
        a_h = _adaptive_pool_matrix(H, s)           # (s, H)
        a_w = _adaptive_pool_matrix(W, s)           # (s, W)
        a_parts.append(np.einsum("ih,jw->ijhw", a_h, a_w).reshape(s * s, HW))
        u_h = _bilinear_matrix(H, s)
        u_w = _bilinear_matrix(W, s)
        u_parts.append(np.einsum("yi,xj->yxij", u_h, u_w).reshape(HW, s * s))
    a_all = jnp.asarray(np.concatenate(a_parts, axis=0), jnp.float32)    # (S2, HW)
    u_np = np.concatenate(u_parts, axis=1)                               # (HW, S2)
    u_all = jnp.asarray(np.pad(u_np, ((0, 0), (0, S2p - S2))), jnp.float32)  # (HW, S2p)

    # ---- ONE streaming pooling pass over the feature map -> 50 px / image ----
    pooled_all = jnp.einsum("ph,nhc->npc", a_all, x_flat_in,
                            preferred_element_type=jnp.float32)          # (N, S2, Cin)

    # ---- bottleneck BN (eval) constants; scale gets folded into weights ----
    g, b, m, v = [p.astype(jnp.float32) for p in params["bottleneck_bn"]]
    scale_b = g / jnp.sqrt(v + eps)                                      # (Cout,)
    shift_b = (b - m * scale_b).reshape(1, Cout)

    # ---- fold stage conv + stage BN + bottleneck slice into R (tiny, f32) ----
    r_parts, off = [], 0
    for idx, s in enumerate(sizes):
        pooled = pooled_all[:, off:off + s * s, :]                       # (N, s*s, Cin)
        off += s * s
        w_s = params["stage_w"][idx].astype(jnp.float32)                 # (Cout, Cin)
        gs, bs, ms, vs = [p.astype(jnp.float32) for p in params["stage_bn"][idx]]
        sc = gs / jnp.sqrt(vs + eps)
        sh = bs - ms * sc
        stage = jnp.einsum("npc,oc->npo", pooled, w_s) * sc + sh         # (N, s*s, Cout)
        wb_s = wb[:, idx * Cout:(idx + 1) * Cout].astype(jnp.float32)    # (Cout, Cout)
        r_parts.append(jnp.einsum("npc,oc->npo", stage, wb_s))           # (N, s*s, Cout)
    r_all = jnp.concatenate(r_parts, axis=1) * scale_b                   # fold BN scale
    r_all = jnp.pad(r_all, ((0, 0), (0, S2p - S2), (0, 0)))              # (N, S2p, Cout)

    # ---- bottleneck weight slice on feats channels: scale folded, bf16 ----
    w_feats = ((wb[:, n_stage * Cout:].astype(jnp.float32)
                * scale_b[:, None]).T).astype(compute_dtype)             # (Cin, Cout)

    # ---- VMEM-aware pixel-row tiling (generation aware via get_tpu_info) ----
    try:
        vmem_cap = int(pltpu.get_tpu_info().vmem_capacity_bytes)
    except Exception:
        vmem_cap = 64 * 2**20            # conservative (v7x-sized) fallback
    budget = int(0.75 * vmem_cap)        # leave headroom for Mosaic scratch
    xb = jnp.dtype(compute_dtype).itemsize
    ob = jnp.dtype(out_dtype).itemsize
    auto_tile, per_row, resident = _pick_row_tile(HW, Cin, Cout, S2p, xb, ob, budget)
    if row_tile is None:
        row_tile = auto_tile
    grid = (N, pl.cdiv(HW, row_tile))    # partial last tile: padded reads, masked stores

    est = resident + per_row * row_tile + (2 << 20)   # incl. f32 acc + scratch headroom
    vmem_limit = int(min(max(est, 32 * 2**20), budget))

    out = pl.pallas_call(
        _psp_bottleneck_kernel,
        out_shape=jax.ShapeDtypeStruct((N, HW, Cout), out_dtype),
        grid_spec=pltpu.PrefetchScalarGridSpec(
            num_scalar_prefetch=0,
            grid=grid,
            in_specs=[
                pl.BlockSpec((1, row_tile, Cin), lambda n, t: (n, t, 0)),
                pl.BlockSpec((row_tile, S2p), lambda n, t: (t, 0)),
                pl.BlockSpec((Cin, Cout), lambda n, t: (0, 0)),           # resident
                pl.BlockSpec((1, S2p, Cout), lambda n, t: (n, 0, 0)),
                pl.BlockSpec((1, Cout), lambda n, t: (0, 0)),
            ],
            out_specs=pl.BlockSpec((1, row_tile, Cout), lambda n, t: (n, t, 0)),
        ),
        compiler_params=pltpu.CompilerParams(
            dimension_semantics=("parallel", "parallel"),
            vmem_limit_bytes=vmem_limit),
    )(x_flat, u_all, w_feats, r_all, shift_b)

    return out.reshape(N, H, W, Cout)


# ----------------------------- parameter init ------------------------------ #
def init_psp_params(key, Cin, Cout, sizes):
    n_stage = len(sizes)
    ks = jax.random.split(key, 5 * (n_stage + 1) + 1)
    params = {"stage_w": [], "stage_bn": []}
    k = 0
    for _ in sizes:
        params["stage_w"].append(
            jax.random.normal(ks[k], (Cout, Cin), jnp.float32) / np.sqrt(Cin)); k += 1
        g = 1.0 + 0.1 * jax.random.normal(ks[k], (Cout,), jnp.float32); k += 1
        b = 0.1 * jax.random.normal(ks[k], (Cout,), jnp.float32); k += 1
        m = 0.1 * jax.random.normal(ks[k], (Cout,), jnp.float32); k += 1
        v = 0.5 + jnp.abs(jax.random.normal(ks[k], (Cout,), jnp.float32)); k += 1
        params["stage_bn"].append((g, b, m, v))
    ctot = Cin + n_stage * Cout
    params["bottleneck_w"] = (
        jax.random.normal(ks[k], (Cout, ctot), jnp.float32) / np.sqrt(ctot)); k += 1
    g = 1.0 + 0.1 * jax.random.normal(ks[k], (Cout,), jnp.float32); k += 1
    b = 0.1 * jax.random.normal(ks[k], (Cout,), jnp.float32); k += 1
    m = 0.1 * jax.random.normal(ks[k], (Cout,), jnp.float32); k += 1
    v = 0.5 + jnp.abs(jax.random.normal(ks[k], (Cout,), jnp.float32)); k += 1
    params["bottleneck_bn"] = (g, b, m, v)
    return params


# ------------------------------- reference --------------------------------- #
def _np_adaptive_avg_pool(x_nchw, s):
    n, c, h, w = x_nchw.shape
    out = np.zeros((n, c, s, s), np.float64)
    for i in range(s):
        h0 = (i * h) // s
        h1 = ((i + 1) * h + s - 1) // s
        for j in range(s):
            w0 = (j * w) // s
            w1 = ((j + 1) * w + s - 1) // s
            out[:, :, i, j] = x_nchw[:, :, h0:h1, w0:w1].mean(axis=(2, 3))
    return out


def _np_bilinear_upsample_ac(x_nchw, H, W):
    n, c, h, w = x_nchw.shape
    out = np.zeros((n, c, H, W), np.float64)
    for y in range(H):
        if h == 1:
            y0 = y1 = 0; fy = 0.0
        else:
            py = 0.0 if H == 1 else y * (h - 1) / (H - 1)
            y0 = min(int(np.floor(py)), h - 1); y1 = min(y0 + 1, h - 1); fy = py - y0
        for xo in range(W):
            if w == 1:
                x0 = x1 = 0; fx = 0.0
            else:
                px = 0.0 if W == 1 else xo * (w - 1) / (W - 1)
                x0 = min(int(np.floor(px)), w - 1); x1 = min(x0 + 1, w - 1); fx = px - x0
            out[:, :, y, xo] = ((1 - fy) * (1 - fx) * x_nchw[:, :, y0, x0]
                                + (1 - fy) * fx * x_nchw[:, :, y0, x1]
                                + fy * (1 - fx) * x_nchw[:, :, y1, x0]
                                + fy * fx * x_nchw[:, :, y1, x1])
    return out


def reference_psp_module(feats_nhwc, params, sizes, eps):
    x = np.asarray(feats_nhwc, np.float64).transpose(0, 3, 1, 2)  # NCHW
    _, _, h, w = x.shape
    priors = []
    for idx, s in enumerate(sizes):
        pooled = _np_adaptive_avg_pool(x, s)
        w_s = np.asarray(params["stage_w"][idx], np.float64)
        conv = np.einsum("oc,ncij->noij", w_s, pooled)
        g, b, m, v = [np.asarray(p, np.float64) for p in params["stage_bn"][idx]]
        bn = ((conv - m[None, :, None, None]) / np.sqrt(v[None, :, None, None] + eps)
              * g[None, :, None, None] + b[None, :, None, None])
        priors.append(_np_bilinear_upsample_ac(bn, h, w))
    priors.append(x)
    cat = np.concatenate(priors, axis=1)
    wb = np.asarray(params["bottleneck_w"], np.float64)
    conv = np.einsum("oc,ncij->noij", wb, cat)
    g, b, m, v = [np.asarray(p, np.float64) for p in params["bottleneck_bn"]]
    bn = ((conv - m[None, :, None, None]) / np.sqrt(v[None, :, None, None] + eps)
          * g[None, :, None, None] + b[None, :, None, None])
    out = np.maximum(bn, 0.0)          # Dropout2d(0.1) is identity in eval mode
    return out.transpose(0, 2, 3, 1)   # NHWC


# ---------------------------------- main ------------------------------------ #
if __name__ == "__main__":
    key = jax.random.PRNGKey(0)
    k_x, k_p, k_x2 = jax.random.split(key, 3)

    # small shapes consistent with the module: PSPModule(features=4, out_features=32)
    N, Cin, H, W = 2, 4, 16, 16
    Cout = 32
    sizes = (1, 2, 3, 6)
    eps = 1e-5

    feats = jax.random.normal(k_x, (N, H, W, Cin), jnp.float32)   # NHWC
    params = init_psp_params(k_p, Cin, Cout, sizes)
    ref = reference_psp_module(feats, params, sizes, eps)

    # default path: bf16 streaming operands, f32 MXU accumulation
    out_bf16 = jax.block_until_ready(
        psp_module_forward(feats, params, sizes=sizes, eps=eps))
    np.testing.assert_allclose(np.asarray(out_bf16, np.float64), ref,
                               rtol=3e-2, atol=3e-2)

    # full f32 path, tight tolerance
    out_f32 = jax.block_until_ready(
        psp_module_forward(feats, params, sizes=sizes, eps=eps,
                           compute_dtype=jnp.float32))
    np.testing.assert_allclose(np.asarray(out_f32), ref, rtol=1e-4, atol=1e-4)

    # non-divisible spatial size: exercises the cdiv grid / masked last tile
    H2 = W2 = 10
    feats2 = jax.random.normal(k_x2, (N, H2, W2, Cin), jnp.float32)
    ref2 = reference_psp_module(feats2, params, sizes, eps)
    out2 = jax.block_until_ready(
        psp_module_forward(feats2, params, sizes=sizes, eps=eps,
                           compute_dtype=jnp.float32, row_tile=64))
    np.testing.assert_allclose(np.asarray(out2), ref2, rtol=1e-4, atol=1e-4)

    print("KERNEL_OK")
</pallas_src>

<mosaic_0001>
module attributes {stable_mosaic.version = 11 : i64} {
  func.func @_psp_bottleneck_kernel(%arg0: i32, %arg1: i32, %arg2: memref<1x256x4xbf16, #tpu.memory_space<vmem>>, %arg3: memref<256x64xf32, #tpu.memory_space<vmem>>, %arg4: memref<4x32xbf16, #tpu.memory_space<vmem>>, %arg5: memref<1x64x32xf32, #tpu.memory_space<vmem>>, %arg6: memref<1x32xf32, #tpu.memory_space<vmem>>, %arg7: memref<1x256x32xf32, #tpu.memory_space<vmem>>) attributes {dimension_semantics = [#tpu.dimension_semantics<parallel>, #tpu.dimension_semantics<parallel>], iteration_bounds = array<i64: 2, 1>, scalar_prefetch = 0 : i64, scratch_operands = 0 : i64, tpu.core_type = #tpu.core_type<tc>, window_params = [{transform_indices = @transform_0, window_bounds = array<i64: 1, 256, 4>}, {transform_indices = @transform_1, window_bounds = array<i64: 256, 64>}, {pipeline_mode = #tpu.pipeline_mode<synchronous>, transform_indices = @transform_2, window_bounds = array<i64: 4, 32>}, {transform_indices = @transform_3, window_bounds = array<i64: 1, 64, 32>}, {pipeline_mode = #tpu.pipeline_mode<synchronous>, transform_indices = @transform_4, window_bounds = array<i64: 1, 32>}, {transform_indices = @transform_5, window_bounds = array<i64: 1, 256, 32>}]} {
    %c0 = arith.constant 0 : index
    %c0_0 = arith.constant 0 : index
    %c0_1 = arith.constant 0 : index
    %0 = vector.load %arg2[%c0, %c0_0, %c0_1] : memref<1x256x4xbf16, #tpu.memory_space<vmem>>, vector<1x256x4xbf16>
    %1 = vector.shape_cast %0 : vector<1x256x4xbf16> to vector<256x4xbf16>
    %c0_2 = arith.constant 0 : index
    %c0_3 = arith.constant 0 : index
    %2 = vector.load %arg4[%c0_2, %c0_3] : memref<4x32xbf16, #tpu.memory_space<vmem>>, vector<4x32xbf16>
    %cst = arith.constant dense<0.000000e+00> : vector<256x32xf32>
    %3 = tpu.matmul %1, %2, %cst {dimension_numbers = #tpu.dot_dimension_numbers<[1], [0], [0], [1], [0, 0, 1, 1], [], []>} : vector<256x4xbf16>, vector<4x32xbf16>, vector<256x32xf32> -> vector<256x32xf32>
    %c0_4 = arith.constant 0 : index
    %c0_5 = arith.constant 0 : index
    %4 = vector.load %arg3[%c0_4, %c0_5] : memref<256x64xf32, #tpu.memory_space<vmem>>, vector<256x64xf32>
    %c0_6 = arith.constant 0 : index
    %c0_7 = arith.constant 0 : index
    %c0_8 = arith.constant 0 : index
    %5 = vector.load %arg5[%c0_6, %c0_7, %c0_8] : memref<1x64x32xf32, #tpu.memory_space<vmem>>, vector<1x64x32xf32>
    %6 = vector.shape_cast %5 : vector<1x64x32xf32> to vector<64x32xf32>
    %cst_9 = arith.constant dense<0.000000e+00> : vector<256x32xf32>
    %7 = tpu.matmul %4, %6, %cst_9 {dimension_numbers = #tpu.dot_dimension_numbers<[1], [0], [0], [1], [0, 0, 1, 1], [], []>} : vector<256x64xf32>, vector<64x32xf32>, vector<256x32xf32> -> vector<256x32xf32>
    %8 = arith.addf %3, %7 : vector<256x32xf32>
    %c0_10 = arith.constant 0 : index
    %c0_11 = arith.constant 0 : index
    %9 = vector.load %arg6[%c0_10, %c0_11] : memref<1x32xf32, #tpu.memory_space<vmem>>, vector<1x32xf32>
    %10 = vector.broadcast %9 : vector<1x32xf32> to vector<256x32xf32>
    %11 = arith.addf %8, %10 : vector<256x32xf32>
    %cst_12 = arith.constant 0.000000e+00 : f32
    %12 = vector.broadcast %cst_12 : f32 to vector<256x32xf32>
    %13 = arith.maximumf %11, %12 : vector<256x32xf32>
    %c0_13 = arith.constant 0 : index
    %c0_14 = arith.constant 0 : index
    %c0_15 = arith.constant 0 : index
    %14 = vector.load %arg7[%c0_13, %c0_14, %c0_15] : memref<1x256x32xf32, #tpu.memory_space<vmem>>, vector<1x256x32xf32>
    %15 = vector.shape_cast %14 : vector<1x256x32xf32> to vector<256x32xf32>
    %16 = vector.shape_cast %13 : vector<256x32xf32> to vector<1x256x32xf32>
    tpu.vector_store %arg7[%c0_13, %c0_14, %c0_15], %16 {strides = array<i32>} : memref<1x256x32xf32, #tpu.memory_space<vmem>>, vector<1x256x32xf32>,
    return
  }
  func.func @transform_0(%arg0: i32, %arg1: i32) -> (i32, i32, i32) {
    %c0_i32 = arith.constant 0 : i32
    %c0_i32_0 = arith.constant 0 : i32
    return %arg0, %arg1, %c0_i32 : i32, i32, i32
  }
  func.func @transform_1(%arg0: i32, %arg1: i32) -> (i32, i32) {
    %c0_i32 = arith.constant 0 : i32
    %c0_i32_0 = arith.constant 0 : i32
    return %arg1, %c0_i32 : i32, i32
  }
  func.func @transform_2(%arg0: i32, %arg1: i32) -> (i32, i32) {
    %c0_i32 = arith.constant 0 : i32
    %c0_i32_0 = arith.constant 0 : i32
    %c0_i32_1 = arith.constant 0 : i32
    return %c0_i32, %c0_i32_0 : i32, i32
  }
  func.func @transform_3(%arg0: i32, %arg1: i32) -> (i32, i32, i32) {
    %c0_i32 = arith.constant 0 : i32
    %c0_i32_0 = arith.constant 0 : i32
    %c0_i32_1 = arith.constant 0 : i32
    return %arg0, %c0_i32, %c0_i32_0 : i32, i32, i32
  }
  func.func @transform_4(%arg0: i32, %arg1: i32) -> (i32, i32) {
    %c0_i32 = arith.constant 0 : i32
    %c0_i32_0 = arith.constant 0 : i32
    %c0_i32_1 = arith.constant 0 : i32
    return %c0_i32, %c0_i32_0 : i32, i32
  }
  func.func @transform_5(%arg0: i32, %arg1: i32) -> (i32, i32, i32) {
    %c0_i32 = arith.constant 0 : i32
    %c0_i32_0 = arith.constant 0 : i32
    return %arg0, %arg1, %c0_i32 : i32, i32, i32
  }
}

</mosaic_0001>

<llo_original>
// kernel: tpu_custom_call.1
$region0: #{tpu_custom_call.1}
  #allocation0 [shape = 'u32[]', space=smem, size = 0x4, offset = 0x4, fixed_abs, tag = 'smem constant byte address 0x4 - core index']
  #allocation1 [shape = 'u32[144,128]{1,0:T(1,128)}', space=vmem, size = 0x12000, scoped, tag = 'internal scratch']
  %s0 = inlined_call_operand.vmem [shape: bf16[2,256,4], index: 0, kind: input, shape index: {}]
  %s1 = inlined_call_operand.vmem [shape: f32[256,64], index: 1, kind: input, shape index: {}]
  %s2 = inlined_call_operand.vmem [shape: bf16[4,32], index: 2, kind: input, shape index: {}]
  %s3 = inlined_call_operand.vmem [shape: f32[2,64,32], index: 3, kind: input, shape index: {}]
  %s4 = inlined_call_operand.vmem [shape: f32[1,32], index: 4, kind: input, shape index: {}]
  %s5 = inlined_call_operand.vmem [shape: f32[2,256,32], index: 5, kind: output, shape index: {}]
  %s6 = sld [smem:[#allocation0]]
  $region53: #{tpu_custom_call.1} parent=0
    _
  %s8 = ssub.s32 1, %s6
  %s9 = scalar_select 0, %s8, %s6
  loop: start=0, step=1, limit=4
  $region2: #{tpu_custom_call.1} parent=0 // loop_pre_header
    _
  $region3: #{tpu_custom_call.1} parent=0 // loop_header
    %s11 = sphi 0, %s15
    %p12 = scmp.ge.s32.totalorder %s11, 4
    %s18 = sphi 0, %s30
    %s19 = sphi 0, %s26
    %s20 = sphi 0, %s18
    %s21 = sphi 0, %s19
    %s22 = sphi 0, %s20
    %s23 = sphi 0, %s21
    %s35 = sphi 0, %s37
    %s38 = sphi 0, %s35
    %s39 = sphi 0, %s38
    %s55 = sphi 0, %s39
    %s61 = sphi 0, %s63
    %s64 = sphi 0, %s61
    %s65 = sphi 0, %s64
    %s81 = sphi 0, %s65
    %s85 = sphi 0, %s85
    %s87 = sphi 0, %s85
    %s88 = sphi 0, %s87
    %s102 = sphi 0, %s88
    %s108 = sphi 0, %s110
    %s111 = sphi 0, %s108
    %s112 = sphi 0, %s111
    %s128 = sphi 0, %s112
    %s132 = sphi 0, %s132
    %s134 = sphi 0, %s132
    %s135 = sphi 0, %s134
    %s149 = sphi 0, %s135
    %s157 = sphi 0, %s159
    %s160 = sphi 0, %s157
    %s161 = sphi 0, %s160
    %s177 = sphi 0, %s161
  $region4: #{tpu_custom_call.1} parent=0 // loop_header_branch
    %14 = sbr.rel (%p12) target = $region8
  $region5: #{tpu_custom_call.1} parent=0 // loop_body
    %s16 = ssub.s32 %s11, 1
    %s17 = ssub.s32 %s11, 2
    %s24 = sadd.s32 1, %s19
    %p25 = scmp.ge.s32.totalorder %s24, 1
    %s26 = scalar_select %p25, 0, %s24
    %s27 = sadd.s32 1, %s18
    %s28 = scalar_select %p25, %s27, %s18
    %p29 = scmp.ge.s32.totalorder %s28, 2
    %s30 = scalar_select %p29, 0, %s28
    %s31 = ssub.s32 %s18, %s30
    %s32 = ssub.s32 %s19, %s26
    %s33 = sor.u32 %s31, %s32
    %p34 = scmp.eq.s32.totalorder %s33, 0
    %s36 = sadd.s32 %s35, 1
    %s37 = scalar_select %p34, %s35, %s36
    %p40 = pneg %p34
    %p41 = scmp.eq.s32.totalorder %s11, 1
    %p42 = por %p40, %p41
    %p43 = scmp.ne.s32.totalorder %s35, %s38
    %p44 = scmp.eq.s32.totalorder %s11, 0
    %p45 = por %p43, %p44
    %p46 = scmp.ne.s32.totalorder %s35, %s38
    %p47 = scmp.eq.s32.totalorder %s16, 1
    %p48 = por %p46, %p47
    %p49 = scmp.ne.s32.totalorder %s38, %s39
    %p50 = scmp.eq.s32.totalorder %s16, 0
    %p51 = por %p49, %p50
    %p52 = scmp.ne.s32.totalorder %s38, %s39
    %p53 = scmp.eq.s32.totalorder %s17, 1
    %p54 = por %p52, %p53
    %p56 = scmp.ne.s32.totalorder %s39, %s55
    %p57 = scmp.eq.s32.totalorder %s17, 0
    %p58 = por %p56, %p57
    %s59 = ssub.s32 %s19, %s26
    %p60 = scmp.eq.s32.totalorder %s59, 0
    %s62 = sadd.s32 %s61, 1
    %s63 = scalar_select %p60, %s61, %s62
    %p66 = pneg %p60
    %p67 = scmp.eq.s32.totalorder %s11, 1
    %p68 = por %p66, %p67
    %p69 = scmp.ne.s32.totalorder %s61, %s64
    %p70 = scmp.eq.s32.totalorder %s11, 0
    %p71 = por %p69, %p70
    %p72 = scmp.ne.s32.totalorder %s61, %s64
    %p73 = scmp.eq.s32.totalorder %s16, 1
    %p74 = por %p72, %p73
    %p75 = scmp.ne.s32.totalorder %s64, %s65
    %p76 = scmp.eq.s32.totalorder %s16, 0
    %p77 = por %p75, %p76
    %p78 = scmp.ne.s32.totalorder %s64, %s65
    %p79 = scmp.eq.s32.totalorder %s17, 1
    %p80 = por %p78, %p79
    %p82 = scmp.ne.s32.totalorder %s65, %s81
    %p83 = scmp.eq.s32.totalorder %s17, 0
    %p84 = por %p82, %p83
    %s86 = sadd.s32 %s85, 1
    %p89 = scmp.eq.s32.totalorder %s11, 1
    %p90 = scmp.ne.s32.totalorder %s85, %s87
    %p91 = scmp.eq.s32.totalorder %s11, 0
    %p92 = por %p90, %p91
    %p93 = scmp.ne.s32.totalorder %s85, %s87
    %p94 = scmp.eq.s32.totalorder %s16, 1
    %p95 = por %p93, %p94
    %p96 = scmp.ne.s32.totalorder %s87, %s88
    %p97 = scmp.eq.s32.totalorder %s16, 0
    %p98 = por %p96, %p97
    %p99 = scmp.ne.s32.totalorder %s87, %s88
    %p100 = scmp.eq.s32.totalorder %s17, 1
    %p101 = por %p99, %p100
    %p103 = scmp.ne.s32.totalorder %s88, %s102
    %p104 = scmp.eq.s32.totalorder %s17, 0
    %p105 = por %p103, %p104
    %s106 = ssub.s32 %s18, %s30
    %p107 = scmp.eq.s32.totalorder %s106, 0
    %s109 = sadd.s32 %s108, 1
    %s110 = scalar_select %p107, %s108, %s109
    %p113 = pneg %p107
    %p114 = scmp.eq.s32.totalorder %s11, 1
    %p115 = por %p113, %p114
    %p116 = scmp.ne.s32.totalorder %s108, %s111
    %p117 = scmp.eq.s32.totalorder %s11, 0
    %p118 = por %p116, %p117
    %p119 = scmp.ne.s32.totalorder %s108, %s111
    %p120 = scmp.eq.s32.totalorder %s16, 1
    %p121 = por %p119, %p120
    %p122 = scmp.ne.s32.totalorder %s111, %s112
    %p123 = scmp.eq.s32.totalorder %s16, 0
    %p124 = por %p122, %p123
    %p125 = scmp.ne.s32.totalorder %s111, %s112
    %p126 = scmp.eq.s32.totalorder %s17, 1
    %p127 = por %p125, %p126
    %p129 = scmp.ne.s32.totalorder %s112, %s128
    %p130 = scmp.eq.s32.totalorder %s17, 0
    %p131 = por %p129, %p130
    %s133 = sadd.s32 %s132, 1
    %p136 = scmp.eq.s32.totalorder %s11, 1
    %p137 = scmp.ne.s32.totalorder %s132, %s134
    %p138 = scmp.eq.s32.totalorder %s11, 0
    %p139 = por %p137, %p138
    %p140 = scmp.ne.s32.totalorder %s132, %s134
    %p141 = scmp.eq.s32.totalorder %s16, 1
    %p142 = por %p140, %p141
    %p143 = scmp.ne.s32.totalorder %s134, %s135
    %p144 = scmp.eq.s32.totalorder %s16, 0
    %p145 = por %p143, %p144
    %p146 = scmp.ne.s32.totalorder %s134, %s135
    %p147 = scmp.eq.s32.totalorder %s17, 1
    %p148 = por %p146, %p147
    %p150 = scmp.ne.s32.totalorder %s135, %s149
    %p151 = scmp.eq.s32.totalorder %s17, 0
    %p152 = por %p150, %p151
    %s153 = ssub.s32 %s18, %s30
    %s154 = ssub.s32 %s19, %s26
    %s155 = sor.u32 %s153, %s154
    %p156 = scmp.eq.s32.totalorder %s155, 0
    %s158 = sadd.s32 %s157, 1
    %s159 = scalar_select %p156, %s157, %s158
    %p162 = pneg %p156
    %p163 = scmp.eq.s32.totalorder %s11, 1
    %p164 = por %p162, %p163
    %p165 = scmp.ne.s32.totalorder %s157, %s160
    %p166 = scmp.eq.s32.totalorder %s11, 0
    %p167 = por %p165, %p166
    %p168 = scmp.ne.s32.totalorder %s157, %s160
    %p169 = scmp.eq.s32.totalorder %s16, 1
    %p170 = por %p168, %p169
    %p171 = scmp.ne.s32.totalorder %s160, %s161
    %p172 = scmp.eq.s32.totalorder %s16, 0
    %p173 = por %p171, %p172
    %p174 = scmp.ne.s32.totalorder %s160, %s161
    %p175 = scmp.eq.s32.totalorder %s17, 1
    %p176 = por %p174, %p175
    %p178 = scmp.ne.s32.totalorder %s161, %s177
    %p179 = scmp.eq.s32.totalorder %s17, 0
    %p180 = por %p178, %p179
    %p181 = scmp.le.s32.totalorder 1, %s11
    %p182 = scmp.lt.s32.totalorder %s11, 3
    %p183 = pnand %p181, %p182
    %p184 = pneg %p183
    // Predicated region
    $region9: #{tpu_custom_call.1} parent=5 // pred_check
      _
    $region10: #{tpu_custom_call.1} parent=5 // pred_check_branch
      %186 = sbr.rel (%p183) target = $region12
    $region11: #{tpu_custom_call.1} parent=5 // pred_region
      %s187 = ssub.s32 %s11, 1
      // Predicated region
      $region13: #{tpu_custom_call.1} parent=11 // pred_check
        %p188 = pneg %p77
      $region14: #{tpu_custom_call.1} parent=11 // pred_check_branch
        %190 = sbr.rel (%p188) target = $region16
      $region15: #{tpu_custom_call.1} parent=11 // pred_region
        %s191 = smul.u32 32, %s21
        %p192 = scmp.lt.s32.totalorder %s191, 31
        %s193 = scalar_select %p192, %s191, 31
        %s194 = smul.addr %s193, 8
        %s195 = scalar_lea.vmem %s1, %s194
        %s196 = smul.u32 32, %s21
      $region16: #{tpu_custom_call.1} parent=11 // pred_fallthru
        _
      // Predicated region
      $region17: #{tpu_custom_call.1} parent=11 // pred_check
        %p197 = pneg %p98
      $region18: #{tpu_custom_call.1} parent=11 // pred_check_branch
        %199 = sbr.rel (%p197) target = $region20
      $region19: #{tpu_custom_call.1} parent=11 // pred_region
        _
      $region20: #{tpu_custom_call.1} parent=11 // pred_fallthru
        _
      // Predicated region
      $region21: #{tpu_custom_call.1} parent=11 // pred_check
        %p200 = pneg %p145
      $region22: #{tpu_custom_call.1} parent=11 // pred_check_branch
        %202 = sbr.rel (%p200) target = $region24
      $region23: #{tpu_custom_call.1} parent=11 // pred_region
        _
      $region24: #{tpu_custom_call.1} parent=11 // pred_fallthru
        _
    $region12: #{tpu_custom_call.1} parent=5 // pred_fallthru
      _
    %p203 = scmp.lt.s32.totalorder %s11, 2
    // Predicated region
    $region25: #{tpu_custom_call.1} parent=5 // pred_check
      %p204 = pneg %p203
    $region26: #{tpu_custom_call.1} parent=5 // pred_check_branch
      %206 = sbr.rel (%p204) target = $region28
    $region27: #{tpu_custom_call.1} parent=5 // pred_region
      // Predicated region
      $region29: #{tpu_custom_call.1} parent=27 // pred_check
        %p207 = pneg %p45
      $region30: #{tpu_custom_call.1} parent=27 // pred_check_branch
        %209 = sbr.rel (%p207) target = $region32
      $region31: #{tpu_custom_call.1} parent=27 // pred_region
        %s210 = smul.u32 32, %s19
        %p211 = scmp.lt.s32.totalorder %s18, 1
        %s212 = scalar_select %p211, %s18, 1
        %p213 = scmp.lt.s32.totalorder %s210, 31
        %s214 = scalar_select %p213, %s210, 31
        %s215 = smul.addr %s212, 32
        %s216 = sadd.s32 %s214, %s215
        %s217 = smul.addr %s216, 4
        %s218 = scalar_lea.vmem %s0, %s217
        %s219 = smul.u32 32, %s19
      $region32: #{tpu_custom_call.1} parent=27 // pred_fallthru
        _
      // Predicated region
      $region33: #{tpu_custom_call.1} parent=27 // pred_check
        %p220 = pneg %p118
      $region34: #{tpu_custom_call.1} parent=27 // pred_check_branch
        %222 = sbr.rel (%p220) target = $region36
      $region35: #{tpu_custom_call.1} parent=27 // pred_region
        %p223 = scmp.lt.s32.totalorder %s18, 1
        %s224 = scalar_select %p223, %s18, 1
        %s225 = smul.addr %s224, 8
        %s226 = smul.addr %s225, 8
        %s227 = scalar_lea.vmem %s3, %s226
      $region36: #{tpu_custom_call.1} parent=27 // pred_fallthru
        _
    $region28: #{tpu_custom_call.1} parent=5 // pred_fallthru
      _
    %p228 = scmp.le.s32.totalorder 1, %s11
    %p229 = scmp.lt.s32.totalorder %s11, 3
    %p230 = pnand %p228, %p229
    %p231 = pneg %p230
    // Predicated region
    $region37: #{tpu_custom_call.1} parent=5 // pred_check
      _
    $region38: #{tpu_custom_call.1} parent=5 // pred_check_branch
      %233 = sbr.rel (%p230) target = $region40
    $region39: #{tpu_custom_call.1} parent=5 // pred_region
      %s234 = ssub.s32 %s11, 1
      %s235 = smul.u32 32, %s21
      %p236 = scmp.lt.s32.totalorder %s20, 1
      %s237 = scalar_select %p236, %s20, 1
      %p238 = scmp.lt.s32.totalorder %s235, 31
      %s239 = scalar_select %p238, %s235, 31
      %s240 = smul.addr %s237, 32
      %s241 = sadd.s32 %s239, %s240
      %s242 = smul.addr %s241, 4
      %s243 = scalar_lea.vmem %s0, %s242
      %p244 = pneg %p51
      %p245 = pneg %p48
      %s246 = smul.u32 32, %s21
      %p247 = scmp.lt.s32.totalorder %s246, 31
      %s248 = scalar_select %p247, %s246, 31
      %s249 = smul.addr %s248, 8
      %s250 = scalar_lea.vmem %s1, %s249
      %p251 = pneg %p77
      %p252 = pneg %p74
      %p253 = pneg %p98
      %p254 = pneg %p95
      %p255 = scmp.lt.s32.totalorder %s20, 1
      %s256 = scalar_select %p255, %s20, 1
      %s257 = smul.addr %s256, 8
      %s258 = smul.addr %s257, 8
      %s259 = scalar_lea.vmem %s3, %s258
      %p260 = pneg %p124
      %p261 = pneg %p121
      %p262 = pneg %p145
      %p263 = pneg %p142
      %p264 = pneg %p173
      %p265 = pneg %p170
      %s266 = smul.u32 32, %s21
      %p267 = scmp.lt.s32.totalorder %s20, 1
      %s268 = scalar_select %p267, %s20, 1
      %p269 = scmp.lt.s32.totalorder %s266, 31
      %s270 = scalar_select %p269, %s266, 31
      %s271 = smul.addr %s268, 32
      %s272 = sadd.s32 %s270, %s271
      %s273 = smul.addr %s272, 8
      %s274 = scalar_lea.vmem %s5, %s273
      %s275 = smul.u32 32, %s21
      %p276 = scmp.lt.s32.totalorder %s20, 1
      %s277 = scalar_select %p276, %s20, 1
      %p278 = scmp.lt.s32.totalorder %s275, 31
      %s279 = scalar_select %p278, %s275, 31
      %s280 = smul.addr %s277, 32
      %s281 = sadd.s32 %s279, %s280
      %s282 = smul.addr %s281, 4
      %s283 = scalar_lea.vmem %s0, %s282
      %s284 = smul.u32 32, %s21
      %s285 = smul.u32 32, %s21
      %p286 = scmp.lt.s32.totalorder %s285, 31
      %s287 = scalar_select %p286, %s285, 31
      %s288 = smul.addr %s287, 8
      %s289 = scalar_lea.vmem %s1, %s288
      %s290 = smul.u32 32, %s21
      %p291 = scmp.lt.s32.totalorder %s20, 1
      %s292 = scalar_select %p291, %s20, 1
      %s293 = smul.addr %s292, 8
      %s294 = smul.addr %s293, 8
      %s295 = scalar_lea.vmem %s3, %s294
      %s296 = smul.u32 32, %s21
      %p297 = scmp.lt.s32.totalorder %s20, 1
      %s298 = scalar_select %p297, %s20, 1
      %p299 = scmp.lt.s32.totalorder %s296, 31
      %s300 = scalar_select %p299, %s296, 31
      %s301 = smul.addr %s298, 32
      %s302 = sadd.s32 %s300, %s301
      %s303 = smul.addr %s302, 8
      %s304 = scalar_lea.vmem %s5, %s303
      %s305 = smul.u32 32, %s21
      %v307 = vld [vmem:[%s283] sm:$0xf]
      %v308 = vld [vmem:[%s283 + $0x4] sm:$0xf]
      %v309 = vld [vmem:[%s283 + $0x8] sm:$0xf]
      %v310 = vld [vmem:[%s283 + $0xc] sm:$0xf]
      %v311 = vld [vmem:[%s283 + $0x10] sm:$0xf]
      %v312 = vld [vmem:[%s283 + $0x14] sm:$0xf]
      %v313 = vld [vmem:[%s283 + $0x18] sm:$0xf]
      %v314 = vld [vmem:[%s283 + $0x1c] sm:$0xf]
      %v315 = vld [vmem:[%s283 + $0x20] sm:$0xf]
      %v316 = vld [vmem:[%s283 + $0x24] sm:$0xf]
      %v317 = vld [vmem:[%s283 + $0x28] sm:$0xf]
      %v318 = vld [vmem:[%s283 + $0x2c] sm:$0xf]
      %v319 = vld [vmem:[%s283 + $0x30] sm:$0xf]
      %v320 = vld [vmem:[%s283 + $0x34] sm:$0xf]
      %v321 = vld [vmem:[%s283 + $0x38] sm:$0xf]
      %v322 = vld [vmem:[%s283 + $0x3c] sm:$0xf]
      %v323 = vld [vmem:[%s283 + $0x40] sm:$0xf]
      %v324 = vld [vmem:[%s283 + $0x44] sm:$0xf]
      %v325 = vld [vmem:[%s283 + $0x48] sm:$0xf]
      %v326 = vld [vmem:[%s283 + $0x4c] sm:$0xf]
      %v327 = vld [vmem:[%s283 + $0x50] sm:$0xf]
      %v328 = vld [vmem:[%s283 + $0x54] sm:$0xf]
      %v329 = vld [vmem:[%s283 + $0x58] sm:$0xf]
      %v330 = vld [vmem:[%s283 + $0x5c] sm:$0xf]
      %v331 = vld [vmem:[%s283 + $0x60] sm:$0xf]
      %v332 = vld [vmem:[%s283 + $0x64] sm:$0xf]
      %v333 = vld [vmem:[%s283 + $0x68] sm:$0xf]
      %v334 = vld [vmem:[%s283 + $0x6c] sm:$0xf]
      %v335 = vld [vmem:[%s283 + $0x70] sm:$0xf]
      %v336 = vld [vmem:[%s283 + $0x74] sm:$0xf]
      %v337 = vld [vmem:[%s283 + $0x78] sm:$0xf]
      %v338 = vld [vmem:[%s283 + $0x7c] sm:$0xf]
      %v339 = vld [vmem:[%s2] sm:$0x3]
      %v340 = vld [vmem:[%s289] sm:$0xff]
      %v341 = vld [vmem:[%s289 + $0x8] sm:$0xff]
      %v342 = vld [vmem:[%s289 + $0x10] sm:$0xff]
      %v343 = vld [vmem:[%s289 + $0x18] sm:$0xff]
      %v344 = vld [vmem:[%s289 + $0x20] sm:$0xff]
      %v345 = vld [vmem:[%s289 + $0x28] sm:$0xff]
      %v346 = vld [vmem:[%s289 + $0x30] sm:$0xff]
      %v347 = vld [vmem:[%s289 + $0x38] sm:$0xff]
      %v348 = vld [vmem:[%s289 + $0x40] sm:$0xff]
      %v349 = vld [vmem:[%s289 + $0x48] sm:$0xff]
      %v350 = vld [vmem:[%s289 + $0x50] sm:$0xff]
      %v351 = vld [vmem:[%s289 + $0x58] sm:$0xff]
      %v352 = vld [vmem:[%s289 + $0x60] sm:$0xff]
      %v353 = vld [vmem:[%s289 + $0x68] sm:$0xff]
      %v354 = vld [vmem:[%s289 + $0x70] sm:$0xff]
      %v355 = vld [vmem:[%s289 + $0x78] sm:$0xff]
      %v356 = vld [vmem:[%s289 + $0x80] sm:$0xff]
      %v357 = vld [vmem:[%s289 + $0x88] sm:$0xff]
      %v358 = vld [vmem:[%s289 + $0x90] sm:$0xff]
      %v359 = vld [vmem:[%s289 + $0x98] sm:$0xff]
      %v360 = vld [vmem:[%s289 + $0xa0] sm:$0xff]
      %v361 = vld [vmem:[%s289 + $0xa8] sm:$0xff]
      %v362 = vld [vmem:[%s289 + $0xb0] sm:$0xff]
      %v363 = vld [vmem:[%s289 + $0xb8] sm:$0xff]
      %v364 = vld [vmem:[%s289 + $0xc0] sm:$0xff]
      %v365 = vld [vmem:[%s289 + $0xc8] sm:$0xff]
      %v366 = vld [vmem:[%s289 + $0xd0] sm:$0xff]
      %v367 = vld [vmem:[%s289 + $0xd8] sm:$0xff]
      %v368 = vld [vmem:[%s289 + $0xe0] sm:$0xff]
      %v369 = vld [vmem:[%s289 + $0xe8] sm:$0xff]
      %v370 = vld [vmem:[%s289 + $0xf0] sm:$0xff]
      %v371 = vld [vmem:[%s289 + $0xf8] sm:$0xff]
      %v372 = vld [vmem:[%s295] sm:$0xff]
      %v373 = vld [vmem:[%s295 + $0x8] sm:$0xff]
      %v374 = vld [vmem:[%s295 + $0x10] sm:$0xff]
      %v375 = vld [vmem:[%s295 + $0x18] sm:$0xff]
      %v376 = vld [vmem:[%s295 + $0x20] sm:$0xff]
      %v377 = vld [vmem:[%s295 + $0x28] sm:$0xff]
      %v378 = vld [vmem:[%s295 + $0x30] sm:$0xff]
      %v379 = vld [vmem:[%s295 + $0x38] sm:$0xff]
      %vm380 = vcmask 523264
      %v382 = vsel %vm380, %v340, 0
      %v385 = vsel %vm380, %v341, 0
      %v388 = vsel %vm380, %v342, 0
      %v391 = vsel %vm380, %v343, 0
      %v394 = vsel %vm380, %v344, 0
      %v397 = vsel %vm380, %v345, 0
      %v400 = vsel %vm380, %v346, 0
      %v403 = vsel %vm380, %v347, 0
      %v406 = vsel %vm380, %v348, 0
      %v409 = vsel %vm380, %v349, 0
      %v412 = vsel %vm380, %v350, 0
      %v415 = vsel %vm380, %v351, 0
      %v418 = vsel %vm380, %v352, 0
      %v421 = vsel %vm380, %v353, 0
      %v424 = vsel %vm380, %v354, 0
      %v427 = vsel %vm380, %v355, 0
      %v430 = vsel %vm380, %v356, 0
      %v433 = vsel %vm380, %v357, 0
      %v436 = vsel %vm380, %v358, 0
      %v439 = vsel %vm380, %v359, 0
      %v442 = vsel %vm380, %v360, 0
      %v445 = vsel %vm380, %v361, 0
      %v448 = vsel %vm380, %v362, 0
      %v451 = vsel %vm380, %v363, 0
      %v454 = vsel %vm380, %v364, 0
      %v457 = vsel %vm380, %v365, 0
      %v460 = vsel %vm380, %v366, 0
      %v463 = vsel %vm380, %v367, 0
      %v466 = vsel %vm380, %v368, 0
      %v469 = vsel %vm380, %v369, 0
      %v472 = vsel %vm380, %v370, 0
      %v475 = vsel %vm380, %v371, 0
      %477 = vmatprep.subr.mxu0 0.0
      %478 = vmatpush1.msra.mxu0 %v372
      %479 = vmatprep.subr.mxu0 0.0
      %480 = vmatpush1.msra.mxu0 %v373
      %481 = vmatprep.subr.mxu0 0.0
      %482 = vmatpush1.msra.mxu0 %v374
      %483 = vmatprep.subr.mxu0 0.0
      %484 = vmatpush1.msra.mxu0 %v375
      %485 = vmatprep.subr.mxu0 0.0
      %486 = vmatpush1.msra.mxu0 %v376
      %487 = vmatprep.subr.mxu0 0.0
      %488 = vmatpush1.msra.mxu0 %v377
      %489 = vmatprep.subr.mxu0 0.0
      %490 = vmatpush1.msra.mxu0 %v378
      %491 = vmatprep.subr.mxu0 0.0
      %492 = vmatpush1.msra.mxu0 %v379
      %493 = vmatprep.subr.mxu0 0.0
      %494 = vmatpush1.msra.mxu0 0.0
      %495 = vmatprep.subr.mxu0 0.0
      %496 = vmatpush1.msra.mxu0 0.0
      %497 = vmatprep.subr.mxu0 0.0
      %498 = vmatpush1.msra.mxu0 0.0
      %499 = vmatprep.subr.mxu0 0.0
      %500 = vmatpush1.msra.mxu0 0.0
      %501 = vmatprep.subr.mxu0 0.0
      %502 = vmatpush1.msra.mxu0 0.0
      %503 = vmatprep.subr.mxu0 0.0
      %504 = vmatpush1.msra.mxu0 0.0
      %505 = vmatprep.subr.mxu0 0.0
      %506 = vmatpush1.msra.mxu0 0.0
      %507 = vmatprep.subr.mxu0 0.0
      %508 = vmatpush1.msra.mxu0 0.0
      %509 = vmatprep.subr.mxu0 0.0
      %510 = vmatpush1.msra.mxu0 0.0
      %511 = vmatprep.subr.mxu0 0.0
      %512 = vmatpush1.msra.mxu0 0.0
      %513 = vmatprep.subr.mxu0 0.0
      %514 = vmatpush1.msra.mxu0 0.0
      %515 = vmatprep.subr.mxu0 0.0
      %516 = vmatpush1.msra.mxu0 0.0
      %517 = vmatprep.subr.mxu0 0.0
      %518 = vmatpush1.msra.mxu0 0.0
      %519 = vmatprep.subr.mxu0 0.0
      %520 = vmatpush1.msra.mxu0 0.0
      %521 = vmatprep.subr.mxu0 0.0
      %522 = vmatpush1.msra.mxu0 0.0
      %523 = vmatprep.subr.mxu0 0.0
      %524 = vmatpush1.msra.mxu0 0.0
      %525 = vmatprep.subr.mxu0 0.0
      %526 = vmatpush1.msra.mxu0 0.0
      %527 = vmatprep.subr.mxu0 0.0
      %528 = vmatpush1.msra.mxu0 0.0
      %529 = vmatprep.subr.mxu0 0.0
      %530 = vmatpush1.msra.mxu0 0.0
      %531 = vmatprep.subr.mxu0 0.0
      %532 = vmatpush1.msra.mxu0 0.0
      %533 = vmatprep.subr.mxu0 0.0
      %534 = vmatpush1.msra.mxu0 0.0
      %535 = vmatprep.subr.mxu0 0.0
      %536 = vmatpush1.msra.mxu0 0.0
      %537 = vmatprep.subr.mxu0 0.0
      %538 = vmatpush1.msra.mxu0 0.0
      %539 = vmatprep.subr.mxu0 0.0
      %540 = vmatpush1.msra.mxu0 0.0
      %541 = vmatprep.mubr.f32.mxu0 0.0
      %542 = vmatmul.mubr.f32.gmra.mrb[0].mxu0 %v382
      %v543 = vpop.f32.mrb[0].mxu0
      %v544 = vadd.f32 0.0, %v543
      %v545 = vpop.f32.mrb[0].mxu0
      %546 = vmatprep.mubr.f32.mxu0 0.0
      %547 = vmatmul.mubr.f32.gmra.mrb[0].mxu0 %v385
      %v548 = vpop.f32.mrb[0].mxu0
      %v549 = vadd.f32 0.0, %v548
      %v550 = vpop.f32.mrb[0].mxu0
      %551 = vmatprep.mubr.f32.mxu0 0.0
      %552 = vmatmul.mubr.f32.gmra.mrb[0].mxu0 %v388
      %v553 = vpop.f32.mrb[0].mxu0
      %v554 = vadd.f32 0.0, %v553
      %v555 = vpop.f32.mrb[0].mxu0
      %556 = vmatprep.mubr.f32.mxu0 0.0
      %557 = vmatmul.mubr.f32.gmra.mrb[0].mxu0 %v391
      %v558 = vpop.f32.mrb[0].mxu0
      %v559 = vadd.f32 0.0, %v558
      %v560 = vpop.f32.mrb[0].mxu0
      %561 = vmatprep.mubr.f32.mxu0 0.0
      %562 = vmatmul.mubr.f32.gmra.mrb[0].mxu0 %v394
      %v563 = vpop.f32.mrb[0].mxu0
      %v564 = vadd.f32 0.0, %v563
      %v565 = vpop.f32.mrb[0].mxu0
      %566 = vmatprep.mubr.f32.mxu0 0.0
      %567 = vmatmul.mubr.f32.gmra.mrb[0].mxu0 %v397
      %v568 = vpop.f32.mrb[0].mxu0
      %v569 = vadd.f32 0.0, %v568
      %v570 = vpop.f32.mrb[0].mxu0
      %571 = vmatprep.mubr.f32.mxu0 0.0
      %572 = vmatmul.mubr.f32.gmra.mrb[0].mxu0 %v400
      %v573 = vpop.f32.mrb[0].mxu0
      %v574 = vadd.f32 0.0, %v573
      %v575 = vpop.f32.mrb[0].mxu0
      %576 = vmatprep.mubr.f32.mxu0 0.0
      %577 = vmatmul.mubr.f32.gmra.mrb[0].mxu0 %v403
      %v578 = vpop.f32.mrb[0].mxu0
      %v579 = vadd.f32 0.0, %v578
      %v580 = vpop.f32.mrb[0].mxu0
      %581 = vmatprep.mubr.f32.mxu0 0.0
      %582 = vmatmul.mubr.f32.gmra.mrb[0].mxu0 %v406
      %v583 = vpop.f32.mrb[0].mxu0
      %v584 = vadd.f32 0.0, %v583
      %v585 = vpop.f32.mrb[0].mxu0
      %586 = vmatprep.mubr.f32.mxu0 0.0
      %587 = vmatmul.mubr.f32.gmra.mrb[0].mxu0 %v409
      %v588 = vpop.f32.mrb[0].mxu0
      %v589 = vadd.f32 0.0, %v588
      %v590 = vpop.f32.mrb[0].mxu0
      %591 = vmatprep.mubr.f32.mxu0 0.0
      %592 = vmatmul.mubr.f32.gmra.mrb[0].mxu0 %v412
      %v593 = vpop.f32.mrb[0].mxu0
      %v594 = vadd.f32 0.0, %v593
      %v595 = vpop.f32.mrb[0].mxu0
      %596 = vmatprep.mubr.f32.mxu0 0.0
      %597 = vmatmul.mubr.f32.gmra.mrb[0].mxu0 %v415
      %v598 = vpop.f32.mrb[0].mxu0
      %v599 = vadd.f32 0.0, %v598
      %v600 = vpop.f32.mrb[0].mxu0
      %601 = vmatprep.mubr.f32.mxu0 0.0
      %602 = vmatmul.mubr.f32.gmra.mrb[0].mxu0 %v418
      %v603 = vpop.f32.mrb[0].mxu0
      %v604 = vadd.f32 0.0, %v603
      %v605 = vpop.f32.mrb[0].mxu0
      %606 = vmatprep.mubr.f32.mxu0 0.0
      %607 = vmatmul.mubr.f32.gmra.mrb[0].mxu0 %v421
      %v608 = vpop.f32.mrb[0].mxu0
      %v609 = vadd.f32 0.0, %v608
      %v610 = vpop.f32.mrb[0].mxu0
      %611 = vmatprep.mubr.f32.mxu0 0.0
      %612 = vmatmul.mubr.f32.gmra.mrb[0].mxu0 %v424
      %v613 = vpop.f32.mrb[0].mxu0
      %v614 = vadd.f32 0.0, %v613
      %v615 = vpop.f32.mrb[0].mxu0
      %616 = vmatprep.mubr.f32.mxu0 0.0
      %617 = vmatmul.mubr.f32.gmra.mrb[0].mxu0 %v427
      %v618 = vpop.f32.mrb[0].mxu0
      %v619 = vadd.f32 0.0, %v618
      %v620 = vpop.f32.mrb[0].mxu0
      %621 = vmatprep.mubr.f32.mxu0 0.0
      %622 = vmatmul.mubr.f32.gmra.mrb[0].mxu0 %v430
      %v623 = vpop.f32.mrb[0].mxu0
      %v624 = vadd.f32 0.0, %v623
      %v625 = vpop.f32.mrb[0].mxu0
      %626 = vmatprep.mubr.f32.mxu0 0.0
      %627 = vmatmul.mubr.f32.gmra.mrb[0].mxu0 %v433
      %v628 = vpop.f32.mrb[0].mxu0
      %v629 = vadd.f32 0.0, %v628
      %v630 = vpop.f32.mrb[0].mxu0
      %631 = vmatprep.mubr.f32.mxu0 0.0
      %632 = vmatmul.mubr.f32.gmra.mrb[0].mxu0 %v436
      %v633 = vpop.f32.mrb[0].mxu0
      %v634 = vadd.f32 0.0, %v633
      %v635 = vpop.f32.mrb[0].mxu0
      %636 = vmatprep.mubr.f32.mxu0 0.0
      %637 = vmatmul.mubr.f32.gmra.mrb[0].mxu0 %v439
      %v638 = vpop.f32.mrb[0].mxu0
      %v639 = vadd.f32 0.0, %v638
      %v640 = vpop.f32.mrb[0].mxu0
      %641 = vmatprep.mubr.f32.mxu0 0.0
      %642 = vmatmul.mubr.f32.gmra.mrb[0].mxu0 %v442
      %v643 = vpop.f32.mrb[0].mxu0
      %v644 = vadd.f32 0.0, %v643
      %v645 = vpop.f32.mrb[0].mxu0
      %646 = vmatprep.mubr.f32.mxu0 0.0
      %647 = vmatmul.mubr.f32.gmra.mrb[0].mxu0 %v445
      %v648 = vpop.f32.mrb[0].mxu0
      %v649 = vadd.f32 0.0, %v648
      %v650 = vpop.f32.mrb[0].mxu0
      %651 = vmatprep.mubr.f32.mxu0 0.0
      %652 = vmatmul.mubr.f32.gmra.mrb[0].mxu0 %v448
      %v653 = vpop.f32.mrb[0].mxu0
      %v654 = vadd.f32 0.0, %v653
      %v655 = vpop.f32.mrb[0].mxu0
      %656 = vmatprep.mubr.f32.mxu0 0.0
      %657 = vmatmul.mubr.f32.gmra.mrb[0].mxu0 %v451
      %v658 = vpop.f32.mrb[0].mxu0
      %v659 = vadd.f32 0.0, %v658
      %v660 = vpop.f32.mrb[0].mxu0
      %661 = vmatprep.mubr.f32.mxu0 0.0
      %662 = vmatmul.mubr.f32.gmra.mrb[0].mxu0 %v454
      %v663 = vpop.f32.mrb[0].mxu0
      %v664 = vadd.f32 0.0, %v663
      %v665 = vpop.f32.mrb[0].mxu0
      %666 = vmatprep.mubr.f32.mxu0 0.0
      %667 = vmatmul.mubr.f32.gmra.mrb[0].mxu0 %v457
      %v668 = vpop.f32.mrb[0].mxu0
      %v669 = vadd.f32 0.0, %v668
      %v670 = vpop.f32.mrb[0].mxu0
      %671 = vmatprep.mubr.f32.mxu0 0.0
      %672 = vmatmul.mubr.f32.gmra.mrb[0].mxu0 %v460
      %v673 = vpop.f32.mrb[0].mxu0
      %v674 = vadd.f32 0.0, %v673
      %v675 = vpop.f32.mrb[0].mxu0
      %676 = vmatprep.mubr.f32.mxu0 0.0
      %677 = vmatmul.mubr.f32.gmra.mrb[0].mxu0 %v463
      %v678 = vpop.f32.mrb[0].mxu0
      %v679 = vadd.f32 0.0, %v678
      %v680 = vpop.f32.mrb[0].mxu0
      %681 = vmatprep.mubr.f32.mxu0 0.0
      %682 = vmatmul.mubr.f32.gmra.mrb[0].mxu0 %v466
      %v683 = vpop.f32.mrb[0].mxu0
      %v684 = vadd.f32 0.0, %v683
      %v685 = vpop.f32.mrb[0].mxu0
      %686 = vmatprep.mubr.f32.mxu0 0.0
      %687 = vmatmul.mubr.f32.gmra.mrb[0].mxu0 %v469
      %v688 = vpop.f32.mrb[0].mxu0
      %v689 = vadd.f32 0.0, %v688
      %v690 = vpop.f32.mrb[0].mxu0
      %691 = vmatprep.mubr.f32.mxu0 0.0
      %692 = vmatmul.mubr.f32.gmra.mrb[0].mxu0 %v472
      %v693 = vpop.f32.mrb[0].mxu0
      %v694 = vadd.f32 0.0, %v693
      %v695 = vpop.f32.mrb[0].mxu0
      %696 = vmatprep.mubr.f32.mxu0 0.0
      %697 = vmatmul.mubr.f32.gmra.mrb[0].mxu0 %v475
      %v698 = vpop.f32.mrb[0].mxu0
      %v699 = vadd.f32 0.0, %v698
      %v700 = vpop.f32.mrb[0].mxu0
      %701 = vdwg.mxu0
      %v734 = vunpack.c.l.b16 %v307
      %v735 = vunpack.c.l.b16 %v308
      %v736 = vunpack.c.l.b16 %v309
      %v737 = vunpack.c.l.b16 %v310
      %v738 = vunpack.c.l.b16 %v311
      %v739 = vunpack.c.l.b16 %v312
      %v740 = vunpack.c.l.b16 %v313
      %v741 = vunpack.c.l.b16 %v314
      %v742 = vunpack.c.l.b16 %v315
      %v743 = vunpack.c.l.b16 %v316
      %v744 = vunpack.c.l.b16 %v317
      %v745 = vunpack.c.l.b16 %v318
      %v746 = vunpack.c.l.b16 %v319
      %v747 = vunpack.c.l.b16 %v320
      %v748 = vunpack.c.l.b16 %v321
      %v749 = vunpack.c.l.b16 %v322
      %v750 = vunpack.c.l.b16 %v323
      %v751 = vunpack.c.l.b16 %v324
      %v752 = vunpack.c.l.b16 %v325
      %v753 = vunpack.c.l.b16 %v326
      %v754 = vunpack.c.l.b16 %v327
      %v755 = vunpack.c.l.b16 %v328
      %v756 = vunpack.c.l.b16 %v329
      %v757 = vunpack.c.l.b16 %v330
      %v758 = vunpack.c.l.b16 %v331
      %v759 = vunpack.c.l.b16 %v332
      %v760 = vunpack.c.l.b16 %v333
      %v761 = vunpack.c.l.b16 %v334
      %v762 = vunpack.c.l.b16 %v335
      %v763 = vunpack.c.l.b16 %v336
      %v764 = vunpack.c.l.b16 %v337
      %v765 = vunpack.c.l.b16 %v338
      %v766 = vpack.c.b16 %v735, %v734
      %v767 = vpack.c.b16 %v737, %v736
      %v768 = vpack.c.b16 %v739, %v738
      %v769 = vpack.c.b16 %v741, %v740
      %v770 = vpack.c.b16 %v743, %v742
      %v771 = vpack.c.b16 %v745, %v744
      %v772 = vpack.c.b16 %v747, %v746
      %v773 = vpack.c.b16 %v749, %v748
      %v774 = vpack.c.b16 %v751, %v750
      %v775 = vpack.c.b16 %v753, %v752
      %v776 = vpack.c.b16 %v755, %v754
      %v777 = vpack.c.b16 %v757, %v756
      %v778 = vpack.c.b16 %v759, %v758
      %v779 = vpack.c.b16 %v761, %v760
      %v780 = vpack.c.b16 %v763, %v762
      %v781 = vpack.c.b16 %v765, %v764
      %vm782 = vcmask 31744
      %v784 = vsel %vm782, %v766, 0
      %v787 = vsel %vm782, %v767, 0
      %v790 = vsel %vm782, %v768, 0
      %v793 = vsel %vm782, %v769, 0
      %v796 = vsel %vm782, %v770, 0
      %v799 = vsel %vm782, %v771, 0
      %v802 = vsel %vm782, %v772, 0
      %v805 = vsel %vm782, %v773, 0
      %v808 = vsel %vm782, %v774, 0
      %v811 = vsel %vm782, %v775, 0
      %v814 = vsel %vm782, %v776, 0
      %v817 = vsel %vm782, %v777, 0
      %v820 = vsel %vm782, %v778, 0
      %v823 = vsel %vm782, %v779, 0
      %v826 = vsel %vm782, %v780, 0
      %v829 = vsel %vm782, %v781, 0
      %vm831 = vcmask 1041408
      %v833 = vsel %vm831, %v339, 0
      %835 = vmatprep.subr.bf16.mxu0 0
      %836 = vmatpush1.bf16.msra.mxu0 %v833
      %837 = vmatprep.subr.bf16.mxu0 0
      %838 = vmatpush1.bf16.msra.mxu0 0
      %839 = vmatprep.subr.bf16.mxu0 0
      %840 = vmatpush1.bf16.msra.mxu0 0
      %841 = vmatprep.subr.bf16.mxu0 0
      %842 = vmatpush1.bf16.msra.mxu0 0
      %843 = vmatprep.subr.bf16.mxu0 0
      %844 = vmatpush1.bf16.msra.mxu0 0
      %845 = vmatprep.subr.bf16.mxu0 0
      %846 = vmatpush1.bf16.msra.mxu0 0
      %847 = vmatprep.subr.bf16.mxu0 0
      %848 = vmatpush1.bf16.msra.mxu0 0
      %849 = vmatprep.subr.bf16.mxu0 0
      %850 = vmatpush1.bf16.msra.mxu0 0
      %851 = vmatprep.subr.bf16.mxu0 0
      %852 = vmatpush1.bf16.msra.mxu0 0
      %853 = vmatprep.subr.bf16.mxu0 0
      %854 = vmatpush1.bf16.msra.mxu0 0
      %855 = vmatprep.subr.bf16.mxu0 0
      %856 = vmatpush1.bf16.msra.mxu0 0
      %857 = vmatprep.subr.bf16.mxu0 0
      %858 = vmatpush1.bf16.msra.mxu0 0
      %859 = vmatprep.subr.bf16.mxu0 0
      %860 = vmatpush1.bf16.msra.mxu0 0
      %861 = vmatprep.subr.bf16.mxu0 0
      %862 = vmatpush1.bf16.msra.mxu0 0
      %863 = vmatprep.subr.bf16.mxu0 0
      %864 = vmatpush1.bf16.msra.mxu0 0
      %865 = vmatprep.subr.bf16.mxu0 0
      %866 = vmatpush1.bf16.msra.mxu0 0
      %867 = vmatprep.mubr.bf16.mxu0 0
      %868 = vmatmul.mubr.bf16.gmra.mrb[0].mxu0 %v784
      %v869 = vpop.f32.mrb[0].mxu0
      %v870 = vadd.f32 %v544, %v869
      %v871 = vpop.f32.mrb[0].mxu0
      %v872 = vpop.f32.mrb[0].mxu0
      %v873 = vadd.f32 %v549, %v872
      %v874 = vpop.f32.mrb[0].mxu0
      %875 = vmatprep.mubr.bf16.mxu0 0
      %876 = vmatmul.mubr.bf16.gmra.mrb[0].mxu0 %v787
      %v877 = vpop.f32.mrb[0].mxu0
      %v878 = vadd.f32 %v554, %v877
      %v879 = vpop.f32.mrb[0].mxu0
      %v880 = vpop.f32.mrb[0].mxu0
      %v881 = vadd.f32 %v559, %v880
      %v882 = vpop.f32.mrb[0].mxu0
      %883 = vmatprep.mubr.bf16.mxu0 0
      %884 = vmatmul.mubr.bf16.gmra.mrb[0].mxu0 %v790
      %v885 = vpop.f32.mrb[0].mxu0
      %v886 = vadd.f32 %v564, %v885
      %v887 = vpop.f32.mrb[0].mxu0
      %v888 = vpop.f32.mrb[0].mxu0
      %v889 = vadd.f32 %v569, %v888
      %v890 = vpop.f32.mrb[0].mxu0
      %891 = vmatprep.mubr.bf16.mxu0 0
      %892 = vmatmul.mubr.bf16.gmra.mrb[0].mxu0 %v793
      %v893 = vpop.f32.mrb[0].mxu0
      %v894 = vadd.f32 %v574, %v893
      %v895 = vpop.f32.mrb[0].mxu0
      %v896 = vpop.f32.mrb[0].mxu0
      %v897 = vadd.f32 %v579, %v896
      %v898 = vpop.f32.mrb[0].mxu0
      %899 = vmatprep.mubr.bf16.mxu0 0
      %900 = vmatmul.mubr.bf16.gmra.mrb[0].mxu0 %v796
      %v901 = vpop.f32.mrb[0].mxu0
      %v902 = vadd.f32 %v584, %v901
      %v903 = vpop.f32.mrb[0].mxu0
      %v904 = vpop.f32.mrb[0].mxu0
      %v905 = vadd.f32 %v589, %v904
      %v906 = vpop.f32.mrb[0].mxu0
      %907 = vmatprep.mubr.bf16.mxu0 0
      %908 = vmatmul.mubr.bf16.gmra.mrb[0].mxu0 %v799
      %v909 = vpop.f32.mrb[0].mxu0
      %v910 = vadd.f32 %v594, %v909
      %v911 = vpop.f32.mrb[0].mxu0
      %v912 = vpop.f32.mrb[0].mxu0
      %v913 = vadd.f32 %v599, %v912
      %v914 = vpop.f32.mrb[0].mxu0
      %915 = vmatprep.mubr.bf16.mxu0 0
      %916 = vmatmul.mubr.bf16.gmra.mrb[0].mxu0 %v802
      %v917 = vpop.f32.mrb[0].mxu0
      %v918 = vadd.f32 %v604, %v917
      %v919 = vpop.f32.mrb[0].mxu0
      %v920 = vpop.f32.mrb[0].mxu0
      %v921 = vadd.f32 %v609, %v920
      %v922 = vpop.f32.mrb[0].mxu0
      %923 = vmatprep.mubr.bf16.mxu0 0
      %924 = vmatmul.mubr.bf16.gmra.mrb[0].mxu0 %v805
      %v925 = vpop.f32.mrb[0].mxu0
      %v926 = vadd.f32 %v614, %v925
      %v927 = vpop.f32.mrb[0].mxu0
      %v928 = vpop.f32.mrb[0].mxu0
      %v929 = vadd.f32 %v619, %v928
      %v930 = vpop.f32.mrb[0].mxu0
      %931 = vmatprep.mubr.bf16.mxu0 0
      %932 = vmatmul.mubr.bf16.gmra.mrb[0].mxu0 %v808
      %v933 = vpop.f32.mrb[0].mxu0
      %v934 = vadd.f32 %v624, %v933
      %v935 = vpop.f32.mrb[0].mxu0
      %v936 = vpop.f32.mrb[0].mxu0
      %v937 = vadd.f32 %v629, %v936
      %v938 = vpop.f32.mrb[0].mxu0
      %939 = vmatprep.mubr.bf16.mxu0 0
      %940 = vmatmul.mubr.bf16.gmra.mrb[0].mxu0 %v811
      %v941 = vpop.f32.mrb[0].mxu0
      %v942 = vadd.f32 %v634, %v941
      %v943 = vpop.f32.mrb[0].mxu0
      %v944 = vpop.f32.mrb[0].mxu0
      %v945 = vadd.f32 %v639, %v944
      %v946 = vpop.f32.mrb[0].mxu0
      %947 = vmatprep.mubr.bf16.mxu0 0
      %948 = vmatmul.mubr.bf16.gmra.mrb[0].mxu0 %v814
      %v949 = vpop.f32.mrb[0].mxu0
      %v950 = vadd.f32 %v644, %v949
      %v951 = vpop.f32.mrb[0].mxu0
      %v952 = vpop.f32.mrb[0].mxu0
      %v953 = vadd.f32 %v649, %v952
      %v954 = vpop.f32.mrb[0].mxu0
      %955 = vmatprep.mubr.bf16.mxu0 0
      %956 = vmatmul.mubr.bf16.gmra.mrb[0].mxu0 %v817
      %v957 = vpop.f32.mrb[0].mxu0
      %v958 = vadd.f32 %v654, %v957
      %v959 = vpop.f32.mrb[0].mxu0
      %v960 = vpop.f32.mrb[0].mxu0
      %v961 = vadd.f32 %v659, %v960
      %v962 = vpop.f32.mrb[0].mxu0
      %963 = vmatprep.mubr.bf16.mxu0 0
      %964 = vmatmul.mubr.bf16.gmra.mrb[0].mxu0 %v820
      %v965 = vpop.f32.mrb[0].mxu0
      %v966 = vadd.f32 %v664, %v965
      %v967 = vpop.f32.mrb[0].mxu0
      %v968 = vpop.f32.mrb[0].mxu0
      %v969 = vadd.f32 %v669, %v968
      %v970 = vpop.f32.mrb[0].mxu0
      %971 = vmatprep.mubr.bf16.mxu0 0
      %972 = vmatmul.mubr.bf16.gmra.mrb[0].mxu0 %v823
      %v973 = vpop.f32.mrb[0].mxu0
      %v974 = vadd.f32 %v674, %v973
      %v975 = vpop.f32.mrb[0].mxu0
      %v976 = vpop.f32.mrb[0].mxu0
      %v977 = vadd.f32 %v679, %v976
      %v978 = vpop.f32.mrb[0].mxu0
      %979 = vmatprep.mubr.bf16.mxu0 0
      %980 = vmatmul.mubr.bf16.gmra.mrb[0].mxu0 %v826
      %v981 = vpop.f32.mrb[0].mxu0
      %v982 = vadd.f32 %v684, %v981
      %v983 = vpop.f32.mrb[0].mxu0
      %v984 = vpop.f32.mrb[0].mxu0
      %v985 = vadd.f32 %v689, %v984
      %v986 = vpop.f32.mrb[0].mxu0
      %987 = vmatprep.mubr.bf16.mxu0 0
      %988 = vmatmul.mubr.bf16.gmra.mrb[0].mxu0 %v829
      %v989 = vpop.f32.mrb[0].mxu0
      %v990 = vadd.f32 %v694, %v989
      %v991 = vpop.f32.mrb[0].mxu0
      %v992 = vpop.f32.mrb[0].mxu0
      %v993 = vadd.f32 %v699, %v992
      %v994 = vpop.f32.mrb[0].mxu0
      %995 = vdwg.mxu0
      %v996 = vld [vmem:[%s4] sm:$0x1]
      %v998 = vlaneseq
      %v999 = vshrl.u32 %v998, 7
      %v1000 = vsub.s32 0, %v999
      %v1001 = vrot.slane %v996, %v1000
      %v1003 = vadd.f32 %v870, %v1001
      %v1004 = vadd.f32 %v873, %v1001
      %v1005 = vadd.f32 %v878, %v1001
      %v1006 = vadd.f32 %v881, %v1001
      %v1007 = vadd.f32 %v886, %v1001
      %v1008 = vadd.f32 %v889, %v1001
      %v1009 = vadd.f32 %v894, %v1001
      %v1010 = vadd.f32 %v897, %v1001
      %v1011 = vadd.f32 %v902, %v1001
      %v1012 = vadd.f32 %v905, %v1001
      %v1013 = vadd.f32 %v910, %v1001
      %v1014 = vadd.f32 %v913, %v1001
      %v1015 = vadd.f32 %v918, %v1001
      %v1016 = vadd.f32 %v921, %v1001
      %v1017 = vadd.f32 %v926, %v1001
      %v1018 = vadd.f32 %v929, %v1001
      %v1019 = vadd.f32 %v934, %v1001
      %v1020 = vadd.f32 %v937, %v1001
      %v1021 = vadd.f32 %v942, %v1001
      %v1022 = vadd.f32 %v945, %v1001
      %v1023 = vadd.f32 %v950, %v1001
      %v1024 = vadd.f32 %v953, %v1001
      %v1025 = vadd.f32 %v958, %v1001
      %v1026 = vadd.f32 %v961, %v1001
      %v1027 = vadd.f32 %v966, %v1001
      %v1028 = vadd.f32 %v969, %v1001
      %v1029 = vadd.f32 %v974, %v1001
      %v1030 = vadd.f32 %v977, %v1001
      %v1031 = vadd.f32 %v982, %v1001
      %v1032 = vadd.f32 %v985, %v1001
      %v1033 = vadd.f32 %v990, %v1001
      %v1034 = vadd.f32 %v993, %v1001
      %v1035 = vmax.f32 %v1003, 0.0
      %v1036 = vmax.f32 %v1004, 0.0
      %v1037 = vmax.f32 %v1005, 0.0
      %v1038 = vmax.f32 %v1006, 0.0
      %v1039 = vmax.f32 %v1007, 0.0
      %v1040 = vmax.f32 %v1008, 0.0
      %v1041 = vmax.f32 %v1009, 0.0
      %v1042 = vmax.f32 %v1010, 0.0
      %v1043 = vmax.f32 %v1011, 0.0
      %v1044 = vmax.f32 %v1012, 0.0
      %v1045 = vmax.f32 %v1013, 0.0
      %v1046 = vmax.f32 %v1014, 0.0
      %v1047 = vmax.f32 %v1015, 0.0
      %v1048 = vmax.f32 %v1016, 0.0
      %v1049 = vmax.f32 %v1017, 0.0
      %v1050 = vmax.f32 %v1018, 0.0
      %v1051 = vmax.f32 %v1019, 0.0
      %v1052 = vmax.f32 %v1020, 0.0
      %v1053 = vmax.f32 %v1021, 0.0
      %v1054 = vmax.f32 %v1022, 0.0
      %v1055 = vmax.f32 %v1023, 0.0
      %v1056 = vmax.f32 %v1024, 0.0
      %v1057 = vmax.f32 %v1025, 0.0
      %v1058 = vmax.f32 %v1026, 0.0
      %v1059 = vmax.f32 %v1027, 0.0
      %v1060 = vmax.f32 %v1028, 0.0
      %v1061 = vmax.f32 %v1029, 0.0
      %v1062 = vmax.f32 %v1030, 0.0
      %v1063 = vmax.f32 %v1031, 0.0
      %v1064 = vmax.f32 %v1032, 0.0
      %v1065 = vmax.f32 %v1033, 0.0
      %v1066 = vmax.f32 %v1034, 0.0
      %vm1067 = vcmask 261120
      %1068 = vst.msk [vmem:[%s304] sm:$0xff] %vm1067, %v1035
      %1069 = vst.msk [vmem:[%s304 + $0x8] sm:$0xff] %vm1067, %v1036
      %1070 = vst.msk [vmem:[%s304 + $0x10] sm:$0xff] %vm1067, %v1037
      %1071 = vst.msk [vmem:[%s304 + $0x18] sm:$0xff] %vm1067, %v1038
      %1072 = vst.msk [vmem:[%s304 + $0x20] sm:$0xff] %vm1067, %v1039
      %1073 = vst.msk [vmem:[%s304 + $0x28] sm:$0xff] %vm1067, %v1040
      %1074 = vst.msk [vmem:[%s304 + $0x30] sm:$0xff] %vm1067, %v1041
      %1075 = vst.msk [vmem:[%s304 + $0x38] sm:$0xff] %vm1067, %v1042
      %1076 = vst.msk [vmem:[%s304 + $0x40] sm:$0xff] %vm1067, %v1043
      %1077 = vst.msk [vmem:[%s304 + $0x48] sm:$0xff] %vm1067, %v1044
      %1078 = vst.msk [vmem:[%s304 + $0x50] sm:$0xff] %vm1067, %v1045
      %1079 = vst.msk [vmem:[%s304 + $0x58] sm:$0xff] %vm1067, %v1046
      %1080 = vst.msk [vmem:[%s304 + $0x60] sm:$0xff] %vm1067, %v1047
      %1081 = vst.msk [vmem:[%s304 + $0x68] sm:$0xff] %vm1067, %v1048
      %1082 = vst.msk [vmem:[%s304 + $0x70] sm:$0xff] %vm1067, %v1049
      %1083 = vst.msk [vmem:[%s304 + $0x78] sm:$0xff] %vm1067, %v1050
      %1084 = vst.msk [vmem:[%s304 + $0x80] sm:$0xff] %vm1067, %v1051
      %1085 = vst.msk [vmem:[%s304 + $0x88] sm:$0xff] %vm1067, %v1052
      %1086 = vst.msk [vmem:[%s304 + $0x90] sm:$0xff] %vm1067, %v1053
      %1087 = vst.msk [vmem:[%s304 + $0x98] sm:$0xff] %vm1067, %v1054
      %1088 = vst.msk [vmem:[%s304 + $0xa0] sm:$0xff] %vm1067, %v1055
      %1089 = vst.msk [vmem:[%s304 + $0xa8] sm:$0xff] %vm1067, %v1056
      %1090 = vst.msk [vmem:[%s304 + $0xb0] sm:$0xff] %vm1067, %v1057
      %1091 = vst.msk [vmem:[%s304 + $0xb8] sm:$0xff] %vm1067, %v1058
      %1092 = vst.msk [vmem:[%s304 + $0xc0] sm:$0xff] %vm1067, %v1059
      %1093 = vst.msk [vmem:[%s304 + $0xc8] sm:$0xff] %vm1067, %v1060
      %1094 = vst.msk [vmem:[%s304 + $0xd0] sm:$0xff] %vm1067, %v1061
      %1095 = vst.msk [vmem:[%s304 + $0xd8] sm:$0xff] %vm1067, %v1062
      %1096 = vst.msk [vmem:[%s304 + $0xe0] sm:$0xff] %vm1067, %v1063
      %1097 = vst.msk [vmem:[%s304 + $0xe8] sm:$0xff] %vm1067, %v1064
      %1098 = vst.msk [vmem:[%s304 + $0xf0] sm:$0xff] %vm1067, %v1065
      %1099 = vst.msk [vmem:[%s304 + $0xf8] sm:$0xff] %vm1067, %v1066
      %s1100 = smul.u32 32, %s21
      %p1101 = scmp.lt.s32.totalorder %s20, 1
      %s1102 = scalar_select %p1101, %s20, 1
      %p1103 = scmp.lt.s32.totalorder %s1100, 31
      %s1104 = scalar_select %p1103, %s1100, 31
      %s1105 = smul.addr %s1102, 32
      %s1106 = sadd.s32 %s1104, %s1105
      %s1107 = smul.addr %s1106, 8
      %s1108 = scalar_lea.vmem %s5, %s1107
      // Predicated region
      $region41: #{tpu_custom_call.1} parent=39 // pred_check
        %p1109 = pneg %p170
      $region42: #{tpu_custom_call.1} parent=39 // pred_check_branch
        %1111 = sbr.rel (%p1109) target = $region44
      $region43: #{tpu_custom_call.1} parent=39 // pred_region
        %s1112 = smul.u32 32, %s21
      $region44: #{tpu_custom_call.1} parent=39 // pred_fallthru
        _
    $region40: #{tpu_custom_call.1} parent=5 // pred_fallthru
      _
    %p1113 = scmp.le.s32.totalorder 2, %s11
    // Predicated region
    $region45: #{tpu_custom_call.1} parent=5 // pred_check
      %p1114 = pneg %p1113
    $region46: #{tpu_custom_call.1} parent=5 // pred_check_branch
      %1116 = sbr.rel (%p1114) target = $region48
    $region47: #{tpu_custom_call.1} parent=5 // pred_region
      %s1117 = ssub.s32 %s11, 2
      // Predicated region
      $region49: #{tpu_custom_call.1} parent=47 // pred_check
        %p1118 = pneg %p176
      $region50: #{tpu_custom_call.1} parent=47 // pred_check_branch
        %1120 = sbr.rel (%p1118) target = $region52
      $region51: #{tpu_custom_call.1} parent=47 // pred_region
        %s1121 = smul.u32 32, %s23
        %p1122 = scmp.lt.s32.totalorder %s22, 1
        %s1123 = scalar_select %p1122, %s22, 1
        %p1124 = scmp.lt.s32.totalorder %s1121, 31
        %s1125 = scalar_select %p1124, %s1121, 31
        %s1126 = smul.addr %s1123, 32
        %s1127 = sadd.s32 %s1125, %s1126
        %s1128 = smul.addr %s1127, 8
        %s1129 = scalar_lea.vmem %s5, %s1128
      $region52: #{tpu_custom_call.1} parent=47 // pred_fallthru
        _
    $region48: #{tpu_custom_call.1} parent=5 // pred_fallthru
      _
  $region6: #{tpu_custom_call.1} parent=0 // loop_footer
    %s15 = sadd.s32 1, %s11
  $region7: #{tpu_custom_call.1} parent=0 // loop_footer_branch
    %10 = sbr.rel target = $region3
  $region8: #{tpu_custom_call.1} parent=0 // loop_exit
    _

</llo_original>
